<compile_context>
chip_gen: v7x
topology: tpu7x:2x2x1
jax: 0.10.0
libtpu: 0.0.40
codegen_flags: <defaults>
</compile_context>

<pallas_src>
import functools
import numpy as np

import jax
import jax.numpy as jnp
from jax.experimental import pallas as pl
from jax.experimental.pallas import tpu as pltpu


# ----------------------------------------------------------------------------
# Kernel
# ----------------------------------------------------------------------------
def _conv1x1_kernel(x_ref, w_ref, b_ref, o_ref, *, batch_block, input_channels,
                    output_height):
    """One program: x (bt, IC, H), w (IC, OC), bias (1, OC) -> out (bt*H, OC)."""
    bt, IC, H = batch_block, input_channels, output_height
    x3 = x_ref[...]                                   # (bt, IC, H)
    # Single relayout for the whole block: (bt, IC, H) -> (bt, H, IC) -> (bt*H, IC).
    # The collapse keeps the minor dim and the merged sublane axis is a multiple
    # of the sublane tile (H=16), so it is a free reinterpretation.
    x2 = jnp.swapaxes(x3, 1, 2).reshape(bt * H, IC)
    w = w_ref[...]                                    # (IC, OC)  — resident
    bias = b_ref[...].astype(jnp.float32)             # (1, OC)   — resident
    # One MXU matmul for the whole block, f32 accumulate.
    y = jnp.dot(x2, w, preferred_element_type=jnp.float32)       # (bt*H, OC)
    y = y + bias                                      # single broadcast add
    o_ref[...] = y.astype(o_ref.dtype)                # single cast + store


def _pick_batch_block(total_batch, cap=256):
    """Large batch block, but >= 2 grid steps when possible (v7x 2-TC sharding).

    cap=256 keeps the double-buffered in/out working set well under the 32 MiB
    scoped-VMEM default on v5e / v6e / v7x for realistic IC / H / OC sizes.
    """
    if total_batch <= 1:
        return 1
    return max(1, min(cap, pl.cdiv(total_batch, 2)))


# ----------------------------------------------------------------------------
# Forward wrapper
# ----------------------------------------------------------------------------
def conv_patch_embed_forward(x, params, *, input_channels, output_height,
                             output_channels, batch_block=None):
    IC, H, OC = input_channels, output_height, output_channels
    # Matches torch: x.view(-1, IC, H, 1) with the trailing singleton dropped.
    x3 = x.reshape(-1, IC, H)                 # pure reshape — no data movement
    Bp = x3.shape[0]
    bt = batch_block if batch_block is not None else _pick_batch_block(Bp)
    bt = max(1, min(bt, Bp))
    grid = (pl.cdiv(Bp, bt),)                 # robust to non-divisible Bp

    kernel = functools.partial(_conv1x1_kernel, batch_block=bt,
                               input_channels=IC, output_height=H)
    out2d = pl.pallas_call(
        kernel,
        out_shape=jax.ShapeDtypeStruct((Bp * H, OC), x.dtype),
        grid=grid,
        in_specs=[
            pl.BlockSpec((bt, IC, H), lambda i: (i, 0, 0)),
            pl.BlockSpec((IC, OC), lambda i: (0, 0)),   # fetched once, reused
            pl.BlockSpec((1, OC), lambda i: (0, 0)),    # fetched once, reused
        ],
        out_specs=pl.BlockSpec((bt * H, OC), lambda i: (i, 0)),
        compiler_params=pltpu.CompilerParams(
            dimension_semantics=("parallel",),
        ),
    )(x3, params["w_t"], params["bias2d"])
    # TODO(synk): the torch forward also does print(x[0][0]) (a debug-only side
    # effect on the conv output); omitted — no clean equivalent in compiled mode.
    return out2d.reshape(Bp, H, OC)           # free leading-dim split


# ----------------------------------------------------------------------------
# Params (deterministic) + pure-JAX reference mirroring the torch forward
# ----------------------------------------------------------------------------
def init_conv_patch_embed_params(key, in_features, output_channels, output_height):
    input_channels = in_features // output_height
    kw, kb = jax.random.split(key)
    weight = 0.02 * jax.random.normal(
        kw, (output_channels, input_channels), jnp.float32)   # Conv2d (OC, IC, 1, 1) squeezed
    bias = 0.02 * jax.random.normal(kb, (output_channels,), jnp.float32)
    params = dict(
        weight=weight,                # torch layout, for the reference
        bias=bias,
        w_t=jnp.asarray(weight.T),    # (IC, OC) — kernel-ready, prepped once at init
        bias2d=bias.reshape(1, -1),   # (1, OC)  — kernel-ready, prepped once at init
    )
    return params, input_channels


def conv_patch_embed_reference(x, weight, bias, input_channels, output_height):
    xv = x.reshape(-1, input_channels, output_height, 1)
    y = jnp.einsum("bihw,oi->bohw", xv, weight) + bias[None, :, None, None]
    return jnp.squeeze(y, -1).transpose(0, 2, 1)


# ----------------------------------------------------------------------------
if __name__ == "__main__":
    in_features = 64
    output_height = 16          # -> input_channels = 4
    output_channels = 32
    B, T = 2, 8                 # leading dims are flattened by the module's view(-1, ...)

    key = jax.random.PRNGKey(0)
    k_param, k_x = jax.random.split(key)
    params, input_channels = init_conv_patch_embed_params(
        k_param, in_features, output_channels, output_height)

    x = jax.random.normal(k_x, (B, T, in_features), jnp.float32)

    y = conv_patch_embed_forward(
        x, params, input_channels=input_channels,
        output_height=output_height, output_channels=output_channels)
    y = jax.block_until_ready(y)

    y_ref = conv_patch_embed_reference(
        x, params["weight"], params["bias"], input_channels, output_height)
    y_ref = jax.block_until_ready(y_ref)

    assert y.shape == (B * T, output_height, output_channels)
    assert np.allclose(np.asarray(y), np.asarray(y_ref), atol=1e-5, rtol=1e-5)
    print("KERNEL_OK")
</pallas_src>

<mosaic_0001>
module attributes {stable_mosaic.version = 11 : i64} {
  func.func @_conv1x1_kernel(%arg0: i32, %arg1: memref<8x4x16xf32, #tpu.memory_space<vmem>>, %arg2: memref<4x32xf32, #tpu.memory_space<vmem>>, %arg3: memref<1x32xf32, #tpu.memory_space<vmem>>, %arg4: memref<128x32xf32, #tpu.memory_space<vmem>>) attributes {dimension_semantics = [#tpu.dimension_semantics<parallel>], iteration_bounds = array<i64: 2>, scalar_prefetch = 0 : i64, scratch_operands = 0 : i64, tpu.core_type = #tpu.core_type<tc>, window_params = [{transform_indices = @transform_0, window_bounds = array<i64: 8, 4, 16>}, {pipeline_mode = #tpu.pipeline_mode<synchronous>, transform_indices = @transform_1, window_bounds = array<i64: 4, 32>}, {pipeline_mode = #tpu.pipeline_mode<synchronous>, transform_indices = @transform_2, window_bounds = array<i64: 1, 32>}, {transform_indices = @transform_3, window_bounds = array<i64: 128, 32>}]} {
    %c0 = arith.constant 0 : index
    %c0_0 = arith.constant 0 : index
    %c0_1 = arith.constant 0 : index
    %0 = vector.load %arg1[%c0, %c0_0, %c0_1] : memref<8x4x16xf32, #tpu.memory_space<vmem>>, vector<8x4x16xf32>
    %1 = tpu.transpose %0, [0, 2, 1] : vector<8x4x16xf32> -> vector<8x16x4xf32>
    %2 = vector.shape_cast %1 : vector<8x16x4xf32> to vector<128x4xf32>
    %c0_2 = arith.constant 0 : index
    %c0_3 = arith.constant 0 : index
    %3 = vector.load %arg2[%c0_2, %c0_3] : memref<4x32xf32, #tpu.memory_space<vmem>>, vector<4x32xf32>
    %c0_4 = arith.constant 0 : index
    %c0_5 = arith.constant 0 : index
    %4 = vector.load %arg3[%c0_4, %c0_5] : memref<1x32xf32, #tpu.memory_space<vmem>>, vector<1x32xf32>
    %cst = arith.constant dense<0.000000e+00> : vector<128x32xf32>
    %5 = tpu.matmul %2, %3, %cst {dimension_numbers = #tpu.dot_dimension_numbers<[1], [0], [0], [1], [0, 0, 1, 1], [], []>} : vector<128x4xf32>, vector<4x32xf32>, vector<128x32xf32> -> vector<128x32xf32>
    %6 = vector.broadcast %4 : vector<1x32xf32> to vector<128x32xf32>
    %7 = arith.addf %5, %6 : vector<128x32xf32>
    %c0_6 = arith.constant 0 : index
    %c0_7 = arith.constant 0 : index
    %8 = vector.load %arg4[%c0_6, %c0_7] : memref<128x32xf32, #tpu.memory_space<vmem>>, vector<128x32xf32>
    tpu.vector_store %arg4[%c0_6, %c0_7], %7 {strides = array<i32>} : memref<128x32xf32, #tpu.memory_space<vmem>>, vector<128x32xf32>,
    return
  }
  func.func @transform_0(%arg0: i32) -> (i32, i32, i32) {
    %c0_i32 = arith.constant 0 : i32
    %c0_i32_0 = arith.constant 0 : i32
    %c0_i32_1 = arith.constant 0 : i32
    return %arg0, %c0_i32, %c0_i32_0 : i32, i32, i32
  }
  func.func @transform_1(%arg0: i32) -> (i32, i32) {
    %c0_i32 = arith.constant 0 : i32
    %c0_i32_0 = arith.constant 0 : i32
    %c0_i32_1 = arith.constant 0 : i32
    return %c0_i32, %c0_i32_0 : i32, i32
  }
  func.func @transform_2(%arg0: i32) -> (i32, i32) {
    %c0_i32 = arith.constant 0 : i32
    %c0_i32_0 = arith.constant 0 : i32
    %c0_i32_1 = arith.constant 0 : i32
    return %c0_i32, %c0_i32_0 : i32, i32
  }
  func.func @transform_3(%arg0: i32) -> (i32, i32) {
    %c0_i32 = arith.constant 0 : i32
    %c0_i32_0 = arith.constant 0 : i32
    return %arg0, %c0_i32 : i32, i32
  }
}

</mosaic_0001>

<llo_original>
// kernel: tpu_custom_call.1
$region0: #{tpu_custom_call.1}
  #allocation0 [shape = 'u32[]', space=smem, size = 0x4, offset = 0x4, fixed_abs, tag = 'smem constant byte address 0x4 - core index']
  #allocation1 [shape = 'u32[144,128]{1,0:T(1,128)}', space=vmem, size = 0x12000, scoped, tag = 'internal scratch']
  %s0 = inlined_call_operand.hbm [shape: f32[16,4,16], index: 0, kind: input, shape index: {}]
  %s1 = inlined_call_operand.hbm [shape: f32[4,32], index: 1, kind: input, shape index: {}]
  %s2 = inlined_call_operand.vmem [shape: f32[1,32], index: 2, kind: input, shape index: {}]
  %s3 = inlined_call_operand.vmem [shape: f32[256,32], index: 3, kind: output, shape index: {}]
  %s4 = sld [smem:[#allocation0]]
  $region53: #{tpu_custom_call.1} parent=0
    _
  %s6 = ssub.s32 1, %s4
  %s7 = scalar_select 0, %s6, %s4
  $region1: #{tpu_custom_call.1} parent=0
    #allocation2 [shape = 'u8[32768]{0}', space=vmem, size = 0x8000, scoped, tag = 'input window, operand 0']
    #allocation3 [shape = 's32[2]{0}', space=sflag, size = 0x8, scoped, tag = 'scoped memory for tpu_custom_call.1']
    #allocation4 [shape = 'u8[2048]{0}', space=vmem, size = 0x800, scoped, tag = 'input window, operand 1, single buffered']
    #allocation5 [shape = 's32[1]{0}', space=sflag, size = 0x4, scoped, tag = 'scoped memory for tpu_custom_call.1']
    %8 = vsyncpa [#allocation3], 0
    %s9 = scalar_lea.sflag [#allocation3], 1
    %10 = vsyncpa %s9, 0
    %11 = vsyncpa [#allocation5], 0
    loop: start=0, step=1, limit=4
    $region2: #{tpu_custom_call.1} parent=1 // loop_pre_header
      _
    $region3: #{tpu_custom_call.1} parent=1 // loop_header
      %s13 = sphi 0, %s17
      %p14 = scmp.ge.s32.totalorder %s13, 4
      %s23 = sphi 0, %s25
      %s26 = sphi 0, %s23
      %s27 = sphi 0, %s26
      %s43 = sphi 0, %s27
      %s47 = sphi 0, %s47
      %s49 = sphi 0, %s47
      %s50 = sphi 0, %s49
      %s64 = sphi 0, %s50
      %s68 = sphi 0, %s68
      %s70 = sphi 0, %s68
      %s71 = sphi 0, %s70
      %s85 = sphi 0, %s71
      %s91 = sphi 0, %s93
      %s94 = sphi 0, %s91
      %s95 = sphi 0, %s94
      %s111 = sphi 0, %s95
    $region4: #{tpu_custom_call.1} parent=1 // loop_header_branch
      %16 = sbr.rel (%p14) target = $region8
    $region5: #{tpu_custom_call.1} parent=1 // loop_body
      %s18 = ssub.s32 %s13, 1
      %s19 = ssub.s32 %s13, 2
      %s20 = sadd.s32 %s13, 1
      %s21 = ssub.s32 %s13, %s20
      %p22 = scmp.eq.s32.totalorder %s21, 0
      %s24 = sadd.s32 %s23, 1
      %s25 = scalar_select %p22, %s23, %s24
      %p28 = pneg %p22
      %p29 = scmp.eq.s32.totalorder %s13, 1
      %p30 = por %p28, %p29
      %p31 = scmp.ne.s32.totalorder %s23, %s26
      %p32 = scmp.eq.s32.totalorder %s13, 0
      %p33 = por %p31, %p32
      %p34 = scmp.ne.s32.totalorder %s23, %s26
      %p35 = scmp.eq.s32.totalorder %s18, 1
      %p36 = por %p34, %p35
      %p37 = scmp.ne.s32.totalorder %s26, %s27
      %p38 = scmp.eq.s32.totalorder %s18, 0
      %p39 = por %p37, %p38
      %p40 = scmp.ne.s32.totalorder %s26, %s27
      %p41 = scmp.eq.s32.totalorder %s19, 1
      %p42 = por %p40, %p41
      %p44 = scmp.ne.s32.totalorder %s27, %s43
      %p45 = scmp.eq.s32.totalorder %s19, 0
      %p46 = por %p44, %p45
      %s48 = sadd.s32 %s47, 1
      %p51 = scmp.eq.s32.totalorder %s13, 1
      %p52 = scmp.ne.s32.totalorder %s47, %s49
      %p53 = scmp.eq.s32.totalorder %s13, 0
      %p54 = por %p52, %p53
      %p55 = scmp.ne.s32.totalorder %s47, %s49
      %p56 = scmp.eq.s32.totalorder %s18, 1
      %p57 = por %p55, %p56
      %p58 = scmp.ne.s32.totalorder %s49, %s50
      %p59 = scmp.eq.s32.totalorder %s18, 0
      %p60 = por %p58, %p59
      %p61 = scmp.ne.s32.totalorder %s49, %s50
      %p62 = scmp.eq.s32.totalorder %s19, 1
      %p63 = por %p61, %p62
      %p65 = scmp.ne.s32.totalorder %s50, %s64
      %p66 = scmp.eq.s32.totalorder %s19, 0
      %p67 = por %p65, %p66
      %s69 = sadd.s32 %s68, 1
      %p72 = scmp.eq.s32.totalorder %s13, 1
      %p73 = scmp.ne.s32.totalorder %s68, %s70
      %p74 = scmp.eq.s32.totalorder %s13, 0
      %p75 = por %p73, %p74
      %p76 = scmp.ne.s32.totalorder %s68, %s70
      %p77 = scmp.eq.s32.totalorder %s18, 1
      %p78 = por %p76, %p77
      %p79 = scmp.ne.s32.totalorder %s70, %s71
      %p80 = scmp.eq.s32.totalorder %s18, 0
      %p81 = por %p79, %p80
      %p82 = scmp.ne.s32.totalorder %s70, %s71
      %p83 = scmp.eq.s32.totalorder %s19, 1
      %p84 = por %p82, %p83
      %p86 = scmp.ne.s32.totalorder %s71, %s85
      %p87 = scmp.eq.s32.totalorder %s19, 0
      %p88 = por %p86, %p87
      %s89 = ssub.s32 %s13, %s20
      %p90 = scmp.eq.s32.totalorder %s89, 0
      %s92 = sadd.s32 %s91, 1
      %s93 = scalar_select %p90, %s91, %s92
      %p96 = pneg %p90
      %p97 = scmp.eq.s32.totalorder %s13, 1
      %p98 = por %p96, %p97
      %p99 = scmp.ne.s32.totalorder %s91, %s94
      %p100 = scmp.eq.s32.totalorder %s13, 0
      %p101 = por %p99, %p100
      %p102 = scmp.ne.s32.totalorder %s91, %s94
      %p103 = scmp.eq.s32.totalorder %s18, 1
      %p104 = por %p102, %p103
      %p105 = scmp.ne.s32.totalorder %s94, %s95
      %p106 = scmp.eq.s32.totalorder %s18, 0
      %p107 = por %p105, %p106
      %p108 = scmp.ne.s32.totalorder %s94, %s95
      %p109 = scmp.eq.s32.totalorder %s19, 1
      %p110 = por %p108, %p109
      %p112 = scmp.ne.s32.totalorder %s95, %s111
      %p113 = scmp.eq.s32.totalorder %s19, 0
      %p114 = por %p112, %p113
      %p115 = scmp.le.s32.totalorder 1, %s13
      %p116 = scmp.lt.s32.totalorder %s13, 3
      %p117 = pnand %p115, %p116
      %p118 = pneg %p117
      // Predicated region
      $region9: #{tpu_custom_call.1} parent=5 // pred_check
        _
      $region10: #{tpu_custom_call.1} parent=5 // pred_check_branch
        %120 = sbr.rel (%p117) target = $region12
      $region11: #{tpu_custom_call.1} parent=5 // pred_region
        %s121 = ssub.s32 %s13, 1
        // Predicated region
        $region13: #{tpu_custom_call.1} parent=11 // pred_check
          %p122 = pneg %p60
        $region14: #{tpu_custom_call.1} parent=11 // pred_check_branch
          %124 = sbr.rel (%p122) target = $region16
        $region15: #{tpu_custom_call.1} parent=11 // pred_region
          %s126 = ssub.s32 64, 64
          %127 = vsyncadd [#allocation5], %s126
          %s129 = sshll.u32 [#allocation4], 4
          %s130 = int_to_ptr.vmem [resolvable:$true] %s129
          %132 = dma.hbm_to_vmem [thread:$0]  %s1, 64, %s130, [#allocation5]
        $region16: #{tpu_custom_call.1} parent=11 // pred_fallthru
          _
        // Predicated region
        $region17: #{tpu_custom_call.1} parent=11 // pred_check
          %p133 = pneg %p81
        $region18: #{tpu_custom_call.1} parent=11 // pred_check_branch
          %135 = sbr.rel (%p133) target = $region20
        $region19: #{tpu_custom_call.1} parent=11 // pred_region
          _
        $region20: #{tpu_custom_call.1} parent=11 // pred_fallthru
          _
      $region12: #{tpu_custom_call.1} parent=5 // pred_fallthru
        _
      %p136 = scmp.lt.s32.totalorder %s13, 2
      // Predicated region
      $region21: #{tpu_custom_call.1} parent=5 // pred_check
        %p137 = pneg %p136
      $region22: #{tpu_custom_call.1} parent=5 // pred_check_branch
        %139 = sbr.rel (%p137) target = $region24
      $region23: #{tpu_custom_call.1} parent=5 // pred_region
        // Predicated region
        $region25: #{tpu_custom_call.1} parent=23 // pred_check
          %p140 = pneg %p33
        $region26: #{tpu_custom_call.1} parent=23 // pred_check_branch
          %142 = sbr.rel (%p140) target = $region28
        $region27: #{tpu_custom_call.1} parent=23 // pred_region
          %s143 = sand.u32 %s23, 1
          %s144 = scalar_lea.sflag [#allocation3], %s143
          %s145 = sand.u32 %s23, 1
          %s146 = smul.addr %s145, 32
          %s147 = scalar_lea.vmem [#allocation2], %s146
          %s148 = smul.u32 8, %s13
          %s150 = ssub.s32 512, 512
          %151 = vsyncadd %s144, %s150
          %s152 = smul.addr %s148, 64
          %s153 = scalar_lea.hbm %s0, %s152
          %s154 = sshll.u32 %s147, 4
          %s155 = int_to_ptr.vmem [resolvable:$true] %s154
          %160 = dma.hbm_to_vmem [thread:$0]  %s153, 512, %s155, %s144, 64, 64, 4
        $region28: #{tpu_custom_call.1} parent=23 // pred_fallthru
          _
      $region24: #{tpu_custom_call.1} parent=5 // pred_fallthru
        _
      %p161 = scmp.le.s32.totalorder 1, %s13
      %p162 = scmp.lt.s32.totalorder %s13, 3
      %p163 = pnand %p161, %p162
      %p164 = pneg %p163
      // Predicated region
      $region29: #{tpu_custom_call.1} parent=5 // pred_check
        _
      $region30: #{tpu_custom_call.1} parent=5 // pred_check_branch
        %166 = sbr.rel (%p163) target = $region32
      $region31: #{tpu_custom_call.1} parent=5 // pred_region
        %s167 = ssub.s32 %s13, 1
        %s168 = sand.u32 %s26, 1
        %s169 = scalar_lea.sflag [#allocation3], %s168
        %s170 = sand.u32 %s26, 1
        %s171 = smul.addr %s170, 32
        %s172 = scalar_lea.vmem [#allocation2], %s171
        // Predicated region
        $region33: #{tpu_custom_call.1} parent=31 // pred_check
          %p173 = pneg %p39
        $region34: #{tpu_custom_call.1} parent=31 // pred_check_branch
          %175 = sbr.rel (%p173) target = $region36
        $region35: #{tpu_custom_call.1} parent=31 // pred_region
          %176 = dma.done %s169, 512
        $region36: #{tpu_custom_call.1} parent=31 // pred_fallthru
          _
        // Predicated region
        $region37: #{tpu_custom_call.1} parent=31 // pred_check
          %p177 = pneg %p60
        $region38: #{tpu_custom_call.1} parent=31 // pred_check_branch
          %179 = sbr.rel (%p177) target = $region40
        $region39: #{tpu_custom_call.1} parent=31 // pred_region
          %180 = dma.done [#allocation5], 64
        $region40: #{tpu_custom_call.1} parent=31 // pred_fallthru
          _
        %s181 = sand.u32 %s26, 1
        %s182 = scalar_lea.sflag [#allocation3], %s181
        %s183 = sand.u32 %s26, 1
        %s184 = smul.addr %s183, 32
        %s185 = scalar_lea.vmem [#allocation2], %s184
        %p186 = pneg %p39
        %p187 = pneg %p36
        %p188 = pneg %p60
        %p189 = pneg %p57
        %p190 = pneg %p81
        %p191 = pneg %p78
        %p192 = pneg %p107
        %p193 = pneg %p104
        %s194 = smul.u32 16, %s18
        %p195 = scmp.lt.s32.totalorder %s194, 31
        %s196 = scalar_select %p195, %s194, 31
        %s197 = smul.addr %s196, 8
        %s198 = scalar_lea.vmem %s3, %s197
        %s199 = smul.u32 8, %s18
        %s200 = smul.u32 16, %s18
        %p201 = scmp.lt.s32.totalorder %s200, 31
        %s202 = scalar_select %p201, %s200, 31
        %s203 = smul.addr %s202, 8
        %s204 = scalar_lea.vmem %s3, %s203
        %s205 = smul.u32 16, %s18
        %v206 = vld [vmem:[%s172] sm:$0xf]
        %v207 = vld [vmem:[%s172 + $0x4] sm:$0xf]
        %v208 = vld [vmem:[%s172 + $0x8] sm:$0xf]
        %v209 = vld [vmem:[%s172 + $0xc] sm:$0xf]
        %v210 = vld [vmem:[%s172 + $0x10] sm:$0xf]
        %v211 = vld [vmem:[%s172 + $0x14] sm:$0xf]
        %v212 = vld [vmem:[%s172 + $0x18] sm:$0xf]
        %v213 = vld [vmem:[%s172 + $0x1c] sm:$0xf]
        %214 = vxpose.xlu0.b32.start [1/16] %v206, 128
        %215 = vxpose.xlu0.b32.cont [2/16] 0.0, 128
        %216 = vxpose.xlu0.b32.cont [3/16] 0.0, 128
        %217 = vxpose.xlu0.b32.cont [4/16] 0.0, 128
        %218 = vxpose.xlu0.b32.cont [5/16] 0.0, 128
        %219 = vxpose.xlu0.b32.cont [6/16] 0.0, 128
        %220 = vxpose.xlu0.b32.cont [7/16] 0.0, 128
        %221 = vxpose.xlu0.b32.cont [8/16] 0.0, 128
        %222 = vxpose.xlu0.b32.cont [9/16] 0.0, 128
        %223 = vxpose.xlu0.b32.cont [10/16] 0.0, 128
        %224 = vxpose.xlu0.b32.cont [11/16] 0.0, 128
        %225 = vxpose.xlu0.b32.cont [12/16] 0.0, 128
        %226 = vxpose.xlu0.b32.cont [13/16] 0.0, 128
        %227 = vxpose.xlu0.b32.cont [14/16] 0.0, 128
        %228 = vxpose.xlu0.b32.cont [15/16] 0.0, 128
        %229 = vxpose.xlu0.b32.end [16/16] 0.0, 128
        %v230 = vpop.trf.xlu0
        %v231 = vpop.trf.xlu0
        %v232 = vpop.trf.xlu0
        %v233 = vpop.trf.xlu0
        %v234 = vpop.trf.xlu0
        %v235 = vpop.trf.xlu0
        %v236 = vpop.trf.xlu0
        %v237 = vpop.trf.xlu0
        %v238 = vpop.trf.xlu0
        %v239 = vpop.trf.xlu0
        %v240 = vpop.trf.xlu0
        %v241 = vpop.trf.xlu0
        %v242 = vpop.trf.xlu0
        %v243 = vpop.trf.xlu0
        %v244 = vpop.trf.xlu0
        %v245 = vpop.trf.xlu0
        %246 = vxpose.xlu0.b32.start [1/16] %v207, 128
        %247 = vxpose.xlu0.b32.cont [2/16] 0.0, 128
        %248 = vxpose.xlu0.b32.cont [3/16] 0.0, 128
        %249 = vxpose.xlu0.b32.cont [4/16] 0.0, 128
        %250 = vxpose.xlu0.b32.cont [5/16] 0.0, 128
        %251 = vxpose.xlu0.b32.cont [6/16] 0.0, 128
        %252 = vxpose.xlu0.b32.cont [7/16] 0.0, 128
        %253 = vxpose.xlu0.b32.cont [8/16] 0.0, 128
        %254 = vxpose.xlu0.b32.cont [9/16] 0.0, 128
        %255 = vxpose.xlu0.b32.cont [10/16] 0.0, 128
        %256 = vxpose.xlu0.b32.cont [11/16] 0.0, 128
        %257 = vxpose.xlu0.b32.cont [12/16] 0.0, 128
        %258 = vxpose.xlu0.b32.cont [13/16] 0.0, 128
        %259 = vxpose.xlu0.b32.cont [14/16] 0.0, 128
        %260 = vxpose.xlu0.b32.cont [15/16] 0.0, 128
        %261 = vxpose.xlu0.b32.end [16/16] 0.0, 128
        %v262 = vpop.trf.xlu0
        %v263 = vpop.trf.xlu0
        %v264 = vpop.trf.xlu0
        %v265 = vpop.trf.xlu0
        %v266 = vpop.trf.xlu0
        %v267 = vpop.trf.xlu0
        %v268 = vpop.trf.xlu0
        %v269 = vpop.trf.xlu0
        %v270 = vpop.trf.xlu0
        %v271 = vpop.trf.xlu0
        %v272 = vpop.trf.xlu0
        %v273 = vpop.trf.xlu0
        %v274 = vpop.trf.xlu0
        %v275 = vpop.trf.xlu0
        %v276 = vpop.trf.xlu0
        %v277 = vpop.trf.xlu0
        %278 = vxpose.xlu0.b32.start [1/16] %v208, 128
        %279 = vxpose.xlu0.b32.cont [2/16] 0.0, 128
        %280 = vxpose.xlu0.b32.cont [3/16] 0.0, 128
        %281 = vxpose.xlu0.b32.cont [4/16] 0.0, 128
        %282 = vxpose.xlu0.b32.cont [5/16] 0.0, 128
        %283 = vxpose.xlu0.b32.cont [6/16] 0.0, 128
        %284 = vxpose.xlu0.b32.cont [7/16] 0.0, 128
        %285 = vxpose.xlu0.b32.cont [8/16] 0.0, 128
        %286 = vxpose.xlu0.b32.cont [9/16] 0.0, 128
        %287 = vxpose.xlu0.b32.cont [10/16] 0.0, 128
        %288 = vxpose.xlu0.b32.cont [11/16] 0.0, 128
        %289 = vxpose.xlu0.b32.cont [12/16] 0.0, 128
        %290 = vxpose.xlu0.b32.cont [13/16] 0.0, 128
        %291 = vxpose.xlu0.b32.cont [14/16] 0.0, 128
        %292 = vxpose.xlu0.b32.cont [15/16] 0.0, 128
        %293 = vxpose.xlu0.b32.end [16/16] 0.0, 128
        %v294 = vpop.trf.xlu0
        %v295 = vpop.trf.xlu0
        %v296 = vpop.trf.xlu0
        %v297 = vpop.trf.xlu0
        %v298 = vpop.trf.xlu0
        %v299 = vpop.trf.xlu0
        %v300 = vpop.trf.xlu0
        %v301 = vpop.trf.xlu0
        %v302 = vpop.trf.xlu0
        %v303 = vpop.trf.xlu0
        %v304 = vpop.trf.xlu0
        %v305 = vpop.trf.xlu0
        %v306 = vpop.trf.xlu0
        %v307 = vpop.trf.xlu0
        %v308 = vpop.trf.xlu0
        %v309 = vpop.trf.xlu0
        %310 = vxpose.xlu0.b32.start [1/16] %v209, 128
        %311 = vxpose.xlu0.b32.cont [2/16] 0.0, 128
        %312 = vxpose.xlu0.b32.cont [3/16] 0.0, 128
        %313 = vxpose.xlu0.b32.cont [4/16] 0.0, 128
        %314 = vxpose.xlu0.b32.cont [5/16] 0.0, 128
        %315 = vxpose.xlu0.b32.cont [6/16] 0.0, 128
        %316 = vxpose.xlu0.b32.cont [7/16] 0.0, 128
        %317 = vxpose.xlu0.b32.cont [8/16] 0.0, 128
        %318 = vxpose.xlu0.b32.cont [9/16] 0.0, 128
        %319 = vxpose.xlu0.b32.cont [10/16] 0.0, 128
        %320 = vxpose.xlu0.b32.cont [11/16] 0.0, 128
        %321 = vxpose.xlu0.b32.cont [12/16] 0.0, 128
        %322 = vxpose.xlu0.b32.cont [13/16] 0.0, 128
        %323 = vxpose.xlu0.b32.cont [14/16] 0.0, 128
        %324 = vxpose.xlu0.b32.cont [15/16] 0.0, 128
        %325 = vxpose.xlu0.b32.end [16/16] 0.0, 128
        %v326 = vpop.trf.xlu0
        %v327 = vpop.trf.xlu0
        %v328 = vpop.trf.xlu0
        %v329 = vpop.trf.xlu0
        %v330 = vpop.trf.xlu0
        %v331 = vpop.trf.xlu0
        %v332 = vpop.trf.xlu0
        %v333 = vpop.trf.xlu0
        %v334 = vpop.trf.xlu0
        %v335 = vpop.trf.xlu0
        %v336 = vpop.trf.xlu0
        %v337 = vpop.trf.xlu0
        %v338 = vpop.trf.xlu0
        %v339 = vpop.trf.xlu0
        %v340 = vpop.trf.xlu0
        %v341 = vpop.trf.xlu0
        %342 = vxpose.xlu0.b32.start [1/16] %v210, 128
        %343 = vxpose.xlu0.b32.cont [2/16] 0.0, 128
        %344 = vxpose.xlu0.b32.cont [3/16] 0.0, 128
        %345 = vxpose.xlu0.b32.cont [4/16] 0.0, 128
        %346 = vxpose.xlu0.b32.cont [5/16] 0.0, 128
        %347 = vxpose.xlu0.b32.cont [6/16] 0.0, 128
        %348 = vxpose.xlu0.b32.cont [7/16] 0.0, 128
        %349 = vxpose.xlu0.b32.cont [8/16] 0.0, 128
        %350 = vxpose.xlu0.b32.cont [9/16] 0.0, 128
        %351 = vxpose.xlu0.b32.cont [10/16] 0.0, 128
        %352 = vxpose.xlu0.b32.cont [11/16] 0.0, 128
        %353 = vxpose.xlu0.b32.cont [12/16] 0.0, 128
        %354 = vxpose.xlu0.b32.cont [13/16] 0.0, 128
        %355 = vxpose.xlu0.b32.cont [14/16] 0.0, 128
        %356 = vxpose.xlu0.b32.cont [15/16] 0.0, 128
        %357 = vxpose.xlu0.b32.end [16/16] 0.0, 128
        %v358 = vpop.trf.xlu0
        %v359 = vpop.trf.xlu0
        %v360 = vpop.trf.xlu0
        %v361 = vpop.trf.xlu0
        %v362 = vpop.trf.xlu0
        %v363 = vpop.trf.xlu0
        %v364 = vpop.trf.xlu0
        %v365 = vpop.trf.xlu0
        %v366 = vpop.trf.xlu0
        %v367 = vpop.trf.xlu0
        %v368 = vpop.trf.xlu0
        %v369 = vpop.trf.xlu0
        %v370 = vpop.trf.xlu0
        %v371 = vpop.trf.xlu0
        %v372 = vpop.trf.xlu0
        %v373 = vpop.trf.xlu0
        %374 = vxpose.xlu0.b32.start [1/16] %v211, 128
        %375 = vxpose.xlu0.b32.cont [2/16] 0.0, 128
        %376 = vxpose.xlu0.b32.cont [3/16] 0.0, 128
        %377 = vxpose.xlu0.b32.cont [4/16] 0.0, 128
        %378 = vxpose.xlu0.b32.cont [5/16] 0.0, 128
        %379 = vxpose.xlu0.b32.cont [6/16] 0.0, 128
        %380 = vxpose.xlu0.b32.cont [7/16] 0.0, 128
        %381 = vxpose.xlu0.b32.cont [8/16] 0.0, 128
        %382 = vxpose.xlu0.b32.cont [9/16] 0.0, 128
        %383 = vxpose.xlu0.b32.cont [10/16] 0.0, 128
        %384 = vxpose.xlu0.b32.cont [11/16] 0.0, 128
        %385 = vxpose.xlu0.b32.cont [12/16] 0.0, 128
        %386 = vxpose.xlu0.b32.cont [13/16] 0.0, 128
        %387 = vxpose.xlu0.b32.cont [14/16] 0.0, 128
        %388 = vxpose.xlu0.b32.cont [15/16] 0.0, 128
        %389 = vxpose.xlu0.b32.end [16/16] 0.0, 128
        %v390 = vpop.trf.xlu0
        %v391 = vpop.trf.xlu0
        %v392 = vpop.trf.xlu0
        %v393 = vpop.trf.xlu0
        %v394 = vpop.trf.xlu0
        %v395 = vpop.trf.xlu0
        %v396 = vpop.trf.xlu0
        %v397 = vpop.trf.xlu0
        %v398 = vpop.trf.xlu0
        %v399 = vpop.trf.xlu0
        %v400 = vpop.trf.xlu0
        %v401 = vpop.trf.xlu0
        %v402 = vpop.trf.xlu0
        %v403 = vpop.trf.xlu0
        %v404 = vpop.trf.xlu0
        %v405 = vpop.trf.xlu0
        %406 = vxpose.xlu0.b32.start [1/16] %v212, 128
        %407 = vxpose.xlu0.b32.cont [2/16] 0.0, 128
        %408 = vxpose.xlu0.b32.cont [3/16] 0.0, 128
        %409 = vxpose.xlu0.b32.cont [4/16] 0.0, 128
        %410 = vxpose.xlu0.b32.cont [5/16] 0.0, 128
        %411 = vxpose.xlu0.b32.cont [6/16] 0.0, 128
        %412 = vxpose.xlu0.b32.cont [7/16] 0.0, 128
        %413 = vxpose.xlu0.b32.cont [8/16] 0.0, 128
        %414 = vxpose.xlu0.b32.cont [9/16] 0.0, 128
        %415 = vxpose.xlu0.b32.cont [10/16] 0.0, 128
        %416 = vxpose.xlu0.b32.cont [11/16] 0.0, 128
        %417 = vxpose.xlu0.b32.cont [12/16] 0.0, 128
        %418 = vxpose.xlu0.b32.cont [13/16] 0.0, 128
        %419 = vxpose.xlu0.b32.cont [14/16] 0.0, 128
        %420 = vxpose.xlu0.b32.cont [15/16] 0.0, 128
        %421 = vxpose.xlu0.b32.end [16/16] 0.0, 128
        %v422 = vpop.trf.xlu0
        %v423 = vpop.trf.xlu0
        %v424 = vpop.trf.xlu0
        %v425 = vpop.trf.xlu0
        %v426 = vpop.trf.xlu0
        %v427 = vpop.trf.xlu0
        %v428 = vpop.trf.xlu0
        %v429 = vpop.trf.xlu0
        %v430 = vpop.trf.xlu0
        %v431 = vpop.trf.xlu0
        %v432 = vpop.trf.xlu0
        %v433 = vpop.trf.xlu0
        %v434 = vpop.trf.xlu0
        %v435 = vpop.trf.xlu0
        %v436 = vpop.trf.xlu0
        %v437 = vpop.trf.xlu0
        %438 = vxpose.xlu0.b32.start [1/16] %v213, 128
        %439 = vxpose.xlu0.b32.cont [2/16] 0.0, 128
        %440 = vxpose.xlu0.b32.cont [3/16] 0.0, 128
        %441 = vxpose.xlu0.b32.cont [4/16] 0.0, 128
        %442 = vxpose.xlu0.b32.cont [5/16] 0.0, 128
        %443 = vxpose.xlu0.b32.cont [6/16] 0.0, 128
        %444 = vxpose.xlu0.b32.cont [7/16] 0.0, 128
        %445 = vxpose.xlu0.b32.cont [8/16] 0.0, 128
        %446 = vxpose.xlu0.b32.cont [9/16] 0.0, 128
        %447 = vxpose.xlu0.b32.cont [10/16] 0.0, 128
        %448 = vxpose.xlu0.b32.cont [11/16] 0.0, 128
        %449 = vxpose.xlu0.b32.cont [12/16] 0.0, 128
        %450 = vxpose.xlu0.b32.cont [13/16] 0.0, 128
        %451 = vxpose.xlu0.b32.cont [14/16] 0.0, 128
        %452 = vxpose.xlu0.b32.cont [15/16] 0.0, 128
        %453 = vxpose.xlu0.b32.end [16/16] 0.0, 128
        %v454 = vpop.trf.xlu0
        %v455 = vpop.trf.xlu0
        %v456 = vpop.trf.xlu0
        %v457 = vpop.trf.xlu0
        %v458 = vpop.trf.xlu0
        %v459 = vpop.trf.xlu0
        %v460 = vpop.trf.xlu0
        %v461 = vpop.trf.xlu0
        %v462 = vpop.trf.xlu0
        %v463 = vpop.trf.xlu0
        %v464 = vpop.trf.xlu0
        %v465 = vpop.trf.xlu0
        %v466 = vpop.trf.xlu0
        %v467 = vpop.trf.xlu0
        %v468 = vpop.trf.xlu0
        %v469 = vpop.trf.xlu0
        %v470 = vld [vmem:[#allocation4] sm:$0xf]
        %v471 = vld [vmem:[%s2] sm:$0x1]
        %v473 = vlaneseq
        %v474 = vshrl.u32 %v473, 7
        %v475 = vsub.s32 0, %v474
        %v476 = vrot.slane %v471, %v475
        %vm478 = vcmask 31744
        %v480 = vsel %vm478, %v230, 0
        %v483 = vsel %vm478, %v231, 0
        %v486 = vsel %vm478, %v262, 0
        %v489 = vsel %vm478, %v263, 0
        %v492 = vsel %vm478, %v294, 0
        %v495 = vsel %vm478, %v295, 0
        %v498 = vsel %vm478, %v326, 0
        %v501 = vsel %vm478, %v327, 0
        %v504 = vsel %vm478, %v358, 0
        %v507 = vsel %vm478, %v359, 0
        %v510 = vsel %vm478, %v390, 0
        %v513 = vsel %vm478, %v391, 0
        %v516 = vsel %vm478, %v422, 0
        %v519 = vsel %vm478, %v423, 0
        %v522 = vsel %vm478, %v454, 0
        %v525 = vsel %vm478, %v455, 0
        %vm527 = vcmask 1043456
        %v529 = vsel %vm527, %v470, 0
        %531 = vmatprep.subr.mxu0 0.0
        %532 = vmatpush1.msra.mxu0 %v529
        %533 = vmatprep.subr.mxu0 0.0
        %534 = vmatpush1.msra.mxu0 0.0
        %535 = vmatprep.subr.mxu0 0.0
        %536 = vmatpush1.msra.mxu0 0.0
        %537 = vmatprep.subr.mxu0 0.0
        %538 = vmatpush1.msra.mxu0 0.0
        %539 = vmatprep.subr.mxu0 0.0
        %540 = vmatpush1.msra.mxu0 0.0
        %541 = vmatprep.subr.mxu0 0.0
        %542 = vmatpush1.msra.mxu0 0.0
        %543 = vmatprep.subr.mxu0 0.0
        %544 = vmatpush1.msra.mxu0 0.0
        %545 = vmatprep.subr.mxu0 0.0
        %546 = vmatpush1.msra.mxu0 0.0
        %547 = vmatprep.subr.mxu0 0.0
        %548 = vmatpush1.msra.mxu0 0.0
        %549 = vmatprep.subr.mxu0 0.0
        %550 = vmatpush1.msra.mxu0 0.0
        %551 = vmatprep.subr.mxu0 0.0
        %552 = vmatpush1.msra.mxu0 0.0
        %553 = vmatprep.subr.mxu0 0.0
        %554 = vmatpush1.msra.mxu0 0.0
        %555 = vmatprep.subr.mxu0 0.0
        %556 = vmatpush1.msra.mxu0 0.0
        %557 = vmatprep.subr.mxu0 0.0
        %558 = vmatpush1.msra.mxu0 0.0
        %559 = vmatprep.subr.mxu0 0.0
        %560 = vmatpush1.msra.mxu0 0.0
        %561 = vmatprep.subr.mxu0 0.0
        %562 = vmatpush1.msra.mxu0 0.0
        %563 = vmatprep.subr.mxu0 0.0
        %564 = vmatpush1.msra.mxu0 0.0
        %565 = vmatprep.subr.mxu0 0.0
        %566 = vmatpush1.msra.mxu0 0.0
        %567 = vmatprep.subr.mxu0 0.0
        %568 = vmatpush1.msra.mxu0 0.0
        %569 = vmatprep.subr.mxu0 0.0
        %570 = vmatpush1.msra.mxu0 0.0
        %571 = vmatprep.subr.mxu0 0.0
        %572 = vmatpush1.msra.mxu0 0.0
        %573 = vmatprep.subr.mxu0 0.0
        %574 = vmatpush1.msra.mxu0 0.0
        %575 = vmatprep.subr.mxu0 0.0
        %576 = vmatpush1.msra.mxu0 0.0
        %577 = vmatprep.subr.mxu0 0.0
        %578 = vmatpush1.msra.mxu0 0.0
        %579 = vmatprep.subr.mxu0 0.0
        %580 = vmatpush1.msra.mxu0 0.0
        %581 = vmatprep.subr.mxu0 0.0
        %582 = vmatpush1.msra.mxu0 0.0
        %583 = vmatprep.subr.mxu0 0.0
        %584 = vmatpush1.msra.mxu0 0.0
        %585 = vmatprep.subr.mxu0 0.0
        %586 = vmatpush1.msra.mxu0 0.0
        %587 = vmatprep.subr.mxu0 0.0
        %588 = vmatpush1.msra.mxu0 0.0
        %589 = vmatprep.subr.mxu0 0.0
        %590 = vmatpush1.msra.mxu0 0.0
        %591 = vmatprep.subr.mxu0 0.0
        %592 = vmatpush1.msra.mxu0 0.0
        %593 = vmatprep.subr.mxu0 0.0
        %594 = vmatpush1.msra.mxu0 0.0
        %595 = vmatprep.mubr.f32.mxu0 0.0
        %596 = vmatmul.mubr.f32.gmra.mrb[0].mxu0 %v480
        %v597 = vpop.f32.mrb[0].mxu0
        %v598 = vadd.f32 %v476, %v597
        %v599 = vpop.f32.mrb[0].mxu0
        %600 = vmatprep.mubr.f32.mxu0 0.0
        %601 = vmatmul.mubr.f32.gmra.mrb[0].mxu0 %v483
        %v602 = vpop.f32.mrb[0].mxu0
        %v603 = vadd.f32 %v476, %v602
        %v604 = vpop.f32.mrb[0].mxu0
        %605 = vmatprep.mubr.f32.mxu0 0.0
        %606 = vmatmul.mubr.f32.gmra.mrb[0].mxu0 %v486
        %v607 = vpop.f32.mrb[0].mxu0
        %v608 = vadd.f32 %v476, %v607
        %v609 = vpop.f32.mrb[0].mxu0
        %610 = vmatprep.mubr.f32.mxu0 0.0
        %611 = vmatmul.mubr.f32.gmra.mrb[0].mxu0 %v489
        %v612 = vpop.f32.mrb[0].mxu0
        %v613 = vadd.f32 %v476, %v612
        %v614 = vpop.f32.mrb[0].mxu0
        %615 = vmatprep.mubr.f32.mxu0 0.0
        %616 = vmatmul.mubr.f32.gmra.mrb[0].mxu0 %v492
        %v617 = vpop.f32.mrb[0].mxu0
        %v618 = vadd.f32 %v476, %v617
        %v619 = vpop.f32.mrb[0].mxu0
        %620 = vmatprep.mubr.f32.mxu0 0.0
        %621 = vmatmul.mubr.f32.gmra.mrb[0].mxu0 %v495
        %v622 = vpop.f32.mrb[0].mxu0
        %v623 = vadd.f32 %v476, %v622
        %v624 = vpop.f32.mrb[0].mxu0
        %625 = vmatprep.mubr.f32.mxu0 0.0
        %626 = vmatmul.mubr.f32.gmra.mrb[0].mxu0 %v498
        %v627 = vpop.f32.mrb[0].mxu0
        %v628 = vadd.f32 %v476, %v627
        %v629 = vpop.f32.mrb[0].mxu0
        %630 = vmatprep.mubr.f32.mxu0 0.0
        %631 = vmatmul.mubr.f32.gmra.mrb[0].mxu0 %v501
        %v632 = vpop.f32.mrb[0].mxu0
        %v633 = vadd.f32 %v476, %v632
        %v634 = vpop.f32.mrb[0].mxu0
        %635 = vmatprep.mubr.f32.mxu0 0.0
        %636 = vmatmul.mubr.f32.gmra.mrb[0].mxu0 %v504
        %v637 = vpop.f32.mrb[0].mxu0
        %v638 = vadd.f32 %v476, %v637
        %v639 = vpop.f32.mrb[0].mxu0
        %640 = vmatprep.mubr.f32.mxu0 0.0
        %641 = vmatmul.mubr.f32.gmra.mrb[0].mxu0 %v507
        %v642 = vpop.f32.mrb[0].mxu0
        %v643 = vadd.f32 %v476, %v642
        %v644 = vpop.f32.mrb[0].mxu0
        %645 = vmatprep.mubr.f32.mxu0 0.0
        %646 = vmatmul.mubr.f32.gmra.mrb[0].mxu0 %v510
        %v647 = vpop.f32.mrb[0].mxu0
        %v648 = vadd.f32 %v476, %v647
        %v649 = vpop.f32.mrb[0].mxu0
        %650 = vmatprep.mubr.f32.mxu0 0.0
        %651 = vmatmul.mubr.f32.gmra.mrb[0].mxu0 %v513
        %v652 = vpop.f32.mrb[0].mxu0
        %v653 = vadd.f32 %v476, %v652
        %v654 = vpop.f32.mrb[0].mxu0
        %655 = vmatprep.mubr.f32.mxu0 0.0
        %656 = vmatmul.mubr.f32.gmra.mrb[0].mxu0 %v516
        %v657 = vpop.f32.mrb[0].mxu0
        %v658 = vadd.f32 %v476, %v657
        %v659 = vpop.f32.mrb[0].mxu0
        %660 = vmatprep.mubr.f32.mxu0 0.0
        %661 = vmatmul.mubr.f32.gmra.mrb[0].mxu0 %v519
        %v662 = vpop.f32.mrb[0].mxu0
        %v663 = vadd.f32 %v476, %v662
        %v664 = vpop.f32.mrb[0].mxu0
        %665 = vmatprep.mubr.f32.mxu0 0.0
        %666 = vmatmul.mubr.f32.gmra.mrb[0].mxu0 %v522
        %v667 = vpop.f32.mrb[0].mxu0
        %v668 = vadd.f32 %v476, %v667
        %v669 = vpop.f32.mrb[0].mxu0
        %670 = vmatprep.mubr.f32.mxu0 0.0
        %671 = vmatmul.mubr.f32.gmra.mrb[0].mxu0 %v525
        %v672 = vpop.f32.mrb[0].mxu0
        %v673 = vadd.f32 %v476, %v672
        %v674 = vpop.f32.mrb[0].mxu0
        %675 = vdwg.mxu0
        %vm676 = vcmask 261120
        %677 = vst.msk [vmem:[%s204] sm:$0xff] %vm676, %v598
        %678 = vst.msk [vmem:[%s204 + $0x8] sm:$0xff] %vm676, %v603
        %679 = vst.msk [vmem:[%s204 + $0x10] sm:$0xff] %vm676, %v608
        %680 = vst.msk [vmem:[%s204 + $0x18] sm:$0xff] %vm676, %v613
        %681 = vst.msk [vmem:[%s204 + $0x20] sm:$0xff] %vm676, %v618
        %682 = vst.msk [vmem:[%s204 + $0x28] sm:$0xff] %vm676, %v623
        %683 = vst.msk [vmem:[%s204 + $0x30] sm:$0xff] %vm676, %v628
        %684 = vst.msk [vmem:[%s204 + $0x38] sm:$0xff] %vm676, %v633
        %685 = vst.msk [vmem:[%s204 + $0x40] sm:$0xff] %vm676, %v638
        %686 = vst.msk [vmem:[%s204 + $0x48] sm:$0xff] %vm676, %v643
        %687 = vst.msk [vmem:[%s204 + $0x50] sm:$0xff] %vm676, %v648
        %688 = vst.msk [vmem:[%s204 + $0x58] sm:$0xff] %vm676, %v653
        %689 = vst.msk [vmem:[%s204 + $0x60] sm:$0xff] %vm676, %v658
        %690 = vst.msk [vmem:[%s204 + $0x68] sm:$0xff] %vm676, %v663
        %691 = vst.msk [vmem:[%s204 + $0x70] sm:$0xff] %vm676, %v668
        %692 = vst.msk [vmem:[%s204 + $0x78] sm:$0xff] %vm676, %v673
        %s693 = smul.u32 16, %s18
        %p694 = scmp.lt.s32.totalorder %s693, 31
        %s695 = scalar_select %p694, %s693, 31
        %s696 = smul.addr %s695, 8
        %s697 = scalar_lea.vmem %s3, %s696
        // Predicated region
        $region41: #{tpu_custom_call.1} parent=31 // pred_check
          %p698 = pneg %p104
        $region42: #{tpu_custom_call.1} parent=31 // pred_check_branch
          %700 = sbr.rel (%p698) target = $region44
        $region43: #{tpu_custom_call.1} parent=31 // pred_region
          %s701 = smul.u32 16, %s18
        $region44: #{tpu_custom_call.1} parent=31 // pred_fallthru
          _
      $region32: #{tpu_custom_call.1} parent=5 // pred_fallthru
        _
      %p702 = scmp.le.s32.totalorder 2, %s13
      // Predicated region
      $region45: #{tpu_custom_call.1} parent=5 // pred_check
        %p703 = pneg %p702
      $region46: #{tpu_custom_call.1} parent=5 // pred_check_branch
        %705 = sbr.rel (%p703) target = $region48
      $region47: #{tpu_custom_call.1} parent=5 // pred_region
        %s706 = ssub.s32 %s13, 2
        // Predicated region
        $region49: #{tpu_custom_call.1} parent=47 // pred_check
          %p707 = pneg %p110
        $region50: #{tpu_custom_call.1} parent=47 // pred_check_branch
          %709 = sbr.rel (%p707) target = $region52
        $region51: #{tpu_custom_call.1} parent=47 // pred_region
          %s710 = smul.u32 16, %s19
          %p711 = scmp.lt.s32.totalorder %s710, 31
          %s712 = scalar_select %p711, %s710, 31
          %s713 = smul.addr %s712, 8
          %s714 = scalar_lea.vmem %s3, %s713
        $region52: #{tpu_custom_call.1} parent=47 // pred_fallthru
          _
      $region48: #{tpu_custom_call.1} parent=5 // pred_fallthru
        _
    $region6: #{tpu_custom_call.1} parent=1 // loop_footer
      %s17 = sadd.s32 1, %s13
    $region7: #{tpu_custom_call.1} parent=1 // loop_footer_branch
      %12 = sbr.rel target = $region3
    $region8: #{tpu_custom_call.1} parent=1 // loop_exit
      _
    %715 = vsyncpa [#allocation3], 1
    %s716 = scalar_lea.sflag [#allocation3], 1
    %717 = vsyncpa %s716, 1
    %718 = vsyncpa [#allocation5], 1

</llo_original>
